<compile_context>
chip_gen: v5e
topology: v5e:2x2
jax: 0.10.0
libtpu: 0.0.40
codegen_flags: <defaults>
</compile_context>

<pallas_src>
import functools

import jax
import jax.numpy as jnp
from jax.experimental import pallas as pl
from jax.experimental.pallas import tpu as pltpu

_LANE = 128
_SUBLANE = 8
_ROW_ALIGN = _LANE * _SUBLANE        # 1024 logical rows = one dense (8, 128) out tile


def _round_up(x, m):
    return ((x + m - 1) // m) * m


def logistic_kernel(b_ref, x_ref, wl_ref, pair_ref, o_ref):
    # b_ref:    SMEM (1,) f32                      -- bias scalar
    # x_ref:    VMEM (S, 256) f32                  -- 128 logical rows per tile-row,
    #                                                 lanes interleaved [x0, x1, x0, x1, ...]
    # wl_ref:   VMEM (1, 256) f32                  -- [w0, w1, w0, w1, ...] lane pattern
    # pair_ref: VMEM (256, 128) bf16 (exact 0/1)   -- pair-sum / de-interleave matrix
    # o_ref:    VMEM (S, 128) f32                  -- sigmoid(z), dense lane/sublane layout
    b = b_ref[0]

    # Exact per-feature scaling on the VPU (keeps the weights in full f32).
    p = x_ref[...] * wl_ref[...]                              # (S, 256) f32

    # De-interleave + pair-sum on the MXU. Two exact bf16 passes (hi/lo split of p
    # against the exact 0/1 matrix) give ~f32 accuracy; the MXU is otherwise idle,
    # so the extra pass is free in this HBM-bound kernel.
    p_hi = p.astype(jnp.bfloat16)
    p_lo = (p - p_hi.astype(jnp.float32)).astype(jnp.bfloat16)
    sel = pair_ref[...]
    z = (jnp.dot(p_hi, sel, preferred_element_type=jnp.float32)
         + jnp.dot(p_lo, sel, preferred_element_type=jnp.float32)
         + b)                                                 # (S, 128) f32

    # sigmoid(z) = 0.5 * tanh(0.5 * z) + 0.5  -- single EUP tanh, no overflow.
    o_ref[...] = (0.5 * jnp.tanh(0.5 * z) + 0.5).astype(o_ref.dtype)


@functools.partial(jax.jit, static_argnames=("block_rows_max",))
def logistic_forward(x, weight, bias, *, block_rows_max=2048):
    """x: (N, 2) f32; weight: (1, 2) f32; bias: (1,) f32 -> (N, 1) f32."""
    n, in_features = x.shape
    assert in_features == 2 and weight.shape == (1, in_features) and bias.shape == (1,)

    x = x.astype(jnp.float32)
    w0 = weight[0, 0].astype(jnp.float32)
    w1 = weight[0, 1].astype(jnp.float32)
    b_flat = bias.reshape(1).astype(jnp.float32)              # -> SMEM scalar

    # --- Tiling: pad N only to the 1024-row layout alignment, then pick the block
    #     row count (multiple of 8, <= block_rows_max) so it evenly divides the grid.
    n_aln = _round_up(max(n, 1), _ROW_ALIGN)
    m_rows = n_aln // _LANE                                   # sublane rows of the (m, 256) view
    steps = max(1, -(-m_rows // block_rows_max))              # cdiv
    s_rows = _round_up(-(-m_rows // steps), _SUBLANE)         # block rows, multiple of 8
    m_rows = s_rows * steps
    n_pad = m_rows * _LANE

    # --- x stays row-major in HBM: flatten (free), pad only the tail, view as (m, 256).
    x_flat = jnp.pad(x.reshape(-1), (0, 2 * n_pad - 2 * n))
    x2d = x_flat.reshape(m_rows, 256)

    # --- Tiny parameter-derived constants (resident in VMEM across all grid steps).
    j = jnp.arange(256)
    k = jnp.arange(_LANE)
    w_lane = jnp.where(j % 2 == 0, w0, w1).astype(jnp.float32).reshape(1, 256)
    pair = ((j[:, None] // 2) == k[None, :]).astype(jnp.bfloat16)   # (256, 128), exact 0/1

    grid = (steps,)
    out2d = pl.pallas_call(
        logistic_kernel,
        out_shape=jax.ShapeDtypeStruct((m_rows, _LANE), jnp.float32),
        grid=grid,
        in_specs=[
            pl.BlockSpec(memory_space=pltpu.MemorySpace.SMEM),       # bias scalar
            pl.BlockSpec((s_rows, 256), lambda i: (i, 0)),           # x tile (dense)
            pl.BlockSpec((1, 256), lambda i: (0, 0)),                # w_lane (resident)
            pl.BlockSpec((256, _LANE), lambda i: (0, 0)),            # pair-sum matrix (resident)
        ],
        out_specs=pl.BlockSpec((s_rows, _LANE), lambda i: (i, 0)),   # dense (S, 128) output
        compiler_params=pltpu.CompilerParams(
            dimension_semantics=("parallel",),                       # v7x: shard steps over 2 TCs
            vmem_limit_bytes=32 * 1024 * 1024,                       # safe on v5e/v6e/v7x
        ),
        cost_estimate=pl.CostEstimate(
            flops=2 * 2 * m_rows * 256 * _LANE + 4 * m_rows * 256,   # two bf16 dots + VPU scale
            transcendentals=m_rows * _LANE,                          # tanh per row
            bytes_accessed=4 * (m_rows * 256 + m_rows * _LANE) + 2 * 256 * _LANE + 4 * 257,
        ),
    )(b_flat, x2d, w_lane, pair)

    # (m, 128) row-major is exactly logical-row order -> free reshape, tail slice.
    return out2d.reshape(-1)[:n].reshape(n, 1)


if __name__ == "__main__":
    key = jax.random.PRNGKey(0)
    kx, kw, kb = jax.random.split(key, 3)

    # Small batch of 2-feature rows; N not a multiple of 1024 to exercise the
    # tail-padding and output-slice paths.
    N = 4000
    x = jax.random.normal(kx, (N, 2), dtype=jnp.float32)

    # Deterministic parameter init (mimics PyTorch's U(-1/sqrt(fan_in), 1/sqrt(fan_in))).
    bound = 1.0 / jnp.sqrt(2.0)
    weight = jax.random.uniform(kw, (1, 2), minval=-bound, maxval=bound, dtype=jnp.float32)
    bias = jax.random.uniform(kb, (1,), minval=-bound, maxval=bound, dtype=jnp.float32)

    out = logistic_forward(x, weight, bias)
    out = jax.block_until_ready(out)

    # Reference in plain JAX. Tolerance is much tighter than the previous 2e-3:
    # exact f32 weight scaling + two-pass bf16 MXU compaction + f32 tanh keep the
    # kernel within ~1e-5 of the f32 reference.
    ref = jax.nn.sigmoid(x @ weight.T + bias[None, :])
    assert out.shape == (N, 1)
    max_err = float(jnp.max(jnp.abs(out - ref)))
    assert jnp.allclose(out, ref, atol=5e-4, rtol=5e-4), max_err

    print("KERNEL_OK")
</pallas_src>

<mosaic_0001>
module attributes {stable_mosaic.version = 11 : i64} {
  func.func @logistic_kernel(%arg0: i32, %arg1: memref<1xf32, #tpu.memory_space<smem>>, %arg2: memref<32x256xf32, #tpu.memory_space<vmem>>, %arg3: memref<1x256xf32, #tpu.memory_space<vmem>>, %arg4: memref<256x128xbf16, #tpu.memory_space<vmem>>, %arg5: memref<32x128xf32, #tpu.memory_space<vmem>>) attributes {dimension_semantics = [#tpu.dimension_semantics<parallel>], iteration_bounds = array<i64: 1>, scalar_prefetch = 0 : i64, scratch_operands = 0 : i64, tpu.core_type = #tpu.core_type<tc>, window_params = [{transform_indices = @transform_0, window_bounds = array<i64: 1>}, {transform_indices = @transform_1, window_bounds = array<i64: 32, 256>}, {pipeline_mode = #tpu.pipeline_mode<synchronous>, transform_indices = @transform_2, window_bounds = array<i64: 1, 256>}, {pipeline_mode = #tpu.pipeline_mode<synchronous>, transform_indices = @transform_3, window_bounds = array<i64: 256, 128>}, {transform_indices = @transform_4, window_bounds = array<i64: 32, 128>}]} {
    %c0 = arith.constant 0 : index
    %0 = memref.load %arg1[%c0] : memref<1xf32, #tpu.memory_space<smem>>
    %c0_0 = arith.constant 0 : index
    %c0_1 = arith.constant 0 : index
    %1 = vector.load %arg2[%c0_0, %c0_1] : memref<32x256xf32, #tpu.memory_space<vmem>>, vector<32x256xf32>
    %c0_2 = arith.constant 0 : index
    %c0_3 = arith.constant 0 : index
    %2 = vector.load %arg3[%c0_2, %c0_3] : memref<1x256xf32, #tpu.memory_space<vmem>>, vector<1x256xf32>
    %3 = vector.broadcast %2 : vector<1x256xf32> to vector<32x256xf32>
    %4 = arith.mulf %1, %3 : vector<32x256xf32>
    %5 = arith.truncf %4 : vector<32x256xf32> to vector<32x256xbf16>
    %6 = arith.extf %5 : vector<32x256xbf16> to vector<32x256xf32>
    %7 = arith.subf %4, %6 : vector<32x256xf32>
    %8 = arith.truncf %7 : vector<32x256xf32> to vector<32x256xbf16>
    %c0_4 = arith.constant 0 : index
    %c0_5 = arith.constant 0 : index
    %9 = vector.load %arg4[%c0_4, %c0_5] : memref<256x128xbf16, #tpu.memory_space<vmem>>, vector<256x128xbf16>
    %cst = arith.constant dense<0.000000e+00> : vector<32x128xf32>
    %10 = tpu.matmul %5, %9, %cst {dimension_numbers = #tpu.dot_dimension_numbers<[1], [0], [0], [1], [0, 0, 1, 1], [], []>} : vector<32x256xbf16>, vector<256x128xbf16>, vector<32x128xf32> -> vector<32x128xf32>
    %cst_6 = arith.constant dense<0.000000e+00> : vector<32x128xf32>
    %11 = tpu.matmul %8, %9, %cst_6 {dimension_numbers = #tpu.dot_dimension_numbers<[1], [0], [0], [1], [0, 0, 1, 1], [], []>} : vector<32x256xbf16>, vector<256x128xbf16>, vector<32x128xf32> -> vector<32x128xf32>
    %12 = arith.addf %10, %11 : vector<32x128xf32>
    %13 = vector.broadcast %0 : f32 to vector<32x128xf32>
    %14 = arith.addf %12, %13 : vector<32x128xf32>
    %cst_7 = arith.constant 5.000000e-01 : f32
    %15 = vector.broadcast %cst_7 : f32 to vector<32x128xf32>
    %16 = arith.mulf %15, %14 : vector<32x128xf32>
    %17 = math.tanh %16 : vector<32x128xf32>
    %cst_8 = arith.constant 5.000000e-01 : f32
    %18 = vector.broadcast %cst_8 : f32 to vector<32x128xf32>
    %19 = arith.mulf %18, %17 : vector<32x128xf32>
    %cst_9 = arith.constant 5.000000e-01 : f32
    %20 = vector.broadcast %cst_9 : f32 to vector<32x128xf32>
    %21 = arith.addf %19, %20 : vector<32x128xf32>
    %c0_10 = arith.constant 0 : index
    %c0_11 = arith.constant 0 : index
    %22 = vector.load %arg5[%c0_10, %c0_11] : memref<32x128xf32, #tpu.memory_space<vmem>>, vector<32x128xf32>
    tpu.vector_store %arg5[%c0_10, %c0_11], %21 {strides = array<i32>} : memref<32x128xf32, #tpu.memory_space<vmem>>, vector<32x128xf32>,
    return
  }
  func.func @transform_0(%arg0: i32) -> i32 {
    %c0_i32 = arith.constant 0 : i32
    %c0_i32_0 = arith.constant 0 : i32
    return %c0_i32 : i32
  }
  func.func @transform_1(%arg0: i32) -> (i32, i32) {
    %c0_i32 = arith.constant 0 : i32
    %c0_i32_0 = arith.constant 0 : i32
    return %arg0, %c0_i32 : i32, i32
  }
  func.func @transform_2(%arg0: i32) -> (i32, i32) {
    %c0_i32 = arith.constant 0 : i32
    %c0_i32_0 = arith.constant 0 : i32
    %c0_i32_1 = arith.constant 0 : i32
    return %c0_i32, %c0_i32_0 : i32, i32
  }
  func.func @transform_3(%arg0: i32) -> (i32, i32) {
    %c0_i32 = arith.constant 0 : i32
    %c0_i32_0 = arith.constant 0 : i32
    %c0_i32_1 = arith.constant 0 : i32
    return %c0_i32, %c0_i32_0 : i32, i32
  }
  func.func @transform_4(%arg0: i32) -> (i32, i32) {
    %c0_i32 = arith.constant 0 : i32
    %c0_i32_0 = arith.constant 0 : i32
    return %arg0, %c0_i32 : i32, i32
  }
}

</mosaic_0001>

<llo_original>
// kernel: logistic_forward.1
$region0: #{logistic_forward.1}
  #allocation0 [shape = 'u32[]', space=smem, size = 0x4, offset = 0x4, fixed_abs, tag = 'smem constant byte address 0x4 - core index']
  #allocation1 [shape = 'u32[72,128]{1,0:T(1,128)}', space=vmem, size = 0x9000, scoped, tag = 'internal scratch']
  #allocation2 [shape = 'f32[1]{0:T(128)S(6)}', space=smem, size = 0x200, scoped, tag = 'scoped memory for logistic_forward.1']
  %s0 = inlined_call_operand.<no memory space> [shape: f32[1], index: 0, kind: input, shape index: {}]
  %s1 = inlined_call_operand.vmem [shape: f32[32,256], index: 1, kind: input, shape index: {}]
  %s2 = inlined_call_operand.vmem [shape: f32[1,256], index: 2, kind: input, shape index: {}]
  %s3 = inlined_call_operand.vmem [shape: bf16[256,128], index: 3, kind: input, shape index: {}]
  %s4 = inlined_call_operand.hbm [shape: f32[32,128], index: 4, kind: output, shape index: {}]
  %s5 = sld [smem:[#allocation0]]
  $region26: #{logistic_forward.1} parent=0
    _
  %s7 = ssub.s32 1, %s5
  %s8 = scalar_select 0, %s7, %s5
  %9 = sst [smem:[#allocation2]] %s0
  $region1: #{logistic_forward.1} parent=0
    #allocation3 [shape = 'u8[16384]{0}', space=vmem, size = 0x4000, scoped, tag = 'output window, operand 0, single buffered']
    #allocation4 [shape = 's32[1]{0}', space=sflag, size = 0x4, scoped, tag = 'scoped memory for logistic_forward.1']
    %10 = vsyncpa [#allocation4], 0
    // Predicated region
    $region2: #{logistic_forward.1} parent=1 // pred_check
      _
    $region3: #{logistic_forward.1} parent=1 // pred_check_branch
      %12 = sbr.rel (0) target = $region5
    $region4: #{logistic_forward.1} parent=1 // pred_region
      _
    $region5: #{logistic_forward.1} parent=1 // pred_fallthru
      _
    // Predicated region
    $region6: #{logistic_forward.1} parent=1 // pred_check
      _
    $region7: #{logistic_forward.1} parent=1 // pred_check_branch
      %14 = sbr.rel (0) target = $region9
    $region8: #{logistic_forward.1} parent=1 // pred_region
      _
    $region9: #{logistic_forward.1} parent=1 // pred_fallthru
      _
    // Predicated region
    $region10: #{logistic_forward.1} parent=1 // pred_check
      _
    $region11: #{logistic_forward.1} parent=1 // pred_check_branch
      %16 = sbr.rel (0) target = $region13
    $region12: #{logistic_forward.1} parent=1 // pred_region
      _
    $region13: #{logistic_forward.1} parent=1 // pred_fallthru
      _
    // Predicated region
    $region14: #{logistic_forward.1} parent=1 // pred_check
      _
    $region15: #{logistic_forward.1} parent=1 // pred_check_branch
      %18 = sbr.rel (0) target = $region17
    $region16: #{logistic_forward.1} parent=1 // pred_region
      _
    $region17: #{logistic_forward.1} parent=1 // pred_fallthru
      _
    %s19 = sld [smem:[#allocation2]]
    %v20 = vld [vmem:[%s1] sm:$0xff]
    %v21 = vld [vmem:[%s1 + $0x8] sm:$0xff]
    %v22 = vld [vmem:[%s1 + $0x10] sm:$0xff]
    %v23 = vld [vmem:[%s1 + $0x18] sm:$0xff]
    %v24 = vld [vmem:[%s1 + $0x20] sm:$0xff]
    %v25 = vld [vmem:[%s1 + $0x28] sm:$0xff]
    %v26 = vld [vmem:[%s1 + $0x30] sm:$0xff]
    %v27 = vld [vmem:[%s1 + $0x38] sm:$0xff]
    %v28 = vld [vmem:[%s2] sm:$0x3]
    %v30 = vperm.slane %v28, 0
    %v31 = vperm.slane %v28, 1
    %v34 = vmul.f32 %v20, %v30
    %v35 = vmul.f32 %v21, %v31
    %v36 = vmul.f32 %v22, %v30
    %v37 = vmul.f32 %v23, %v31
    %v38 = vmul.f32 %v24, %v30
    %v39 = vmul.f32 %v25, %v31
    %v40 = vmul.f32 %v26, %v30
    %v41 = vmul.f32 %v27, %v31
    %v42 = vpack.c.bf16 %v35, %v34
    %v43 = vpack.c.bf16 %v37, %v36
    %v44 = vpack.c.bf16 %v39, %v38
    %v45 = vpack.c.bf16 %v41, %v40
    %v46 = vunpack.c.l.bf16 %v42
    %v47 = vunpack.c.h.bf16 %v42
    %v48 = vunpack.c.l.bf16 %v43
    %v49 = vunpack.c.h.bf16 %v43
    %v50 = vunpack.c.l.bf16 %v44
    %v51 = vunpack.c.h.bf16 %v44
    %v52 = vunpack.c.l.bf16 %v45
    %v53 = vunpack.c.h.bf16 %v45
    %v54 = vsub.f32 %v34, %v46
    %v55 = vsub.f32 %v35, %v47
    %v56 = vsub.f32 %v36, %v48
    %v57 = vsub.f32 %v37, %v49
    %v58 = vsub.f32 %v38, %v50
    %v59 = vsub.f32 %v39, %v51
    %v60 = vsub.f32 %v40, %v52
    %v61 = vsub.f32 %v41, %v53
    %v62 = vpack.c.bf16 %v56, %v54
    %v63 = vpack.c.bf16 %v57, %v55
    %v64 = vpack.c.bf16 %v60, %v58
    %v65 = vpack.c.bf16 %v61, %v59
    %v66 = vld [vmem:[%s3] sm:$0xf]
    %v67 = vld [vmem:[%s3 + $0x4] sm:$0xf]
    %v68 = vld [vmem:[%s3 + $0x8] sm:$0xf]
    %v69 = vld [vmem:[%s3 + $0xc] sm:$0xf]
    %v70 = vld [vmem:[%s3 + $0x10] sm:$0xf]
    %v71 = vld [vmem:[%s3 + $0x14] sm:$0xf]
    %v72 = vld [vmem:[%s3 + $0x18] sm:$0xf]
    %v73 = vld [vmem:[%s3 + $0x1c] sm:$0xf]
    %v74 = vld [vmem:[%s3 + $0x20] sm:$0xf]
    %v75 = vld [vmem:[%s3 + $0x24] sm:$0xf]
    %v76 = vld [vmem:[%s3 + $0x28] sm:$0xf]
    %v77 = vld [vmem:[%s3 + $0x2c] sm:$0xf]
    %v78 = vld [vmem:[%s3 + $0x30] sm:$0xf]
    %v79 = vld [vmem:[%s3 + $0x34] sm:$0xf]
    %v80 = vld [vmem:[%s3 + $0x38] sm:$0xf]
    %v81 = vld [vmem:[%s3 + $0x3c] sm:$0xf]
    %v82 = vld [vmem:[%s3 + $0x40] sm:$0xf]
    %v83 = vld [vmem:[%s3 + $0x44] sm:$0xf]
    %v84 = vld [vmem:[%s3 + $0x48] sm:$0xf]
    %v85 = vld [vmem:[%s3 + $0x4c] sm:$0xf]
    %v86 = vld [vmem:[%s3 + $0x50] sm:$0xf]
    %v87 = vld [vmem:[%s3 + $0x54] sm:$0xf]
    %v88 = vld [vmem:[%s3 + $0x58] sm:$0xf]
    %v89 = vld [vmem:[%s3 + $0x5c] sm:$0xf]
    %v90 = vld [vmem:[%s3 + $0x60] sm:$0xf]
    %v91 = vld [vmem:[%s3 + $0x64] sm:$0xf]
    %v92 = vld [vmem:[%s3 + $0x68] sm:$0xf]
    %v93 = vld [vmem:[%s3 + $0x6c] sm:$0xf]
    %v94 = vld [vmem:[%s3 + $0x70] sm:$0xf]
    %v95 = vld [vmem:[%s3 + $0x74] sm:$0xf]
    %v96 = vld [vmem:[%s3 + $0x78] sm:$0xf]
    %v97 = vld [vmem:[%s3 + $0x7c] sm:$0xf]
    %v130 = vunpack.c.l.b16 %v66
    %v131 = vunpack.c.l.b16 %v67
    %v132 = vunpack.c.l.b16 %v68
    %v133 = vunpack.c.l.b16 %v69
    %v134 = vunpack.c.l.b16 %v70
    %v135 = vunpack.c.l.b16 %v71
    %v136 = vunpack.c.l.b16 %v72
    %v137 = vunpack.c.l.b16 %v73
    %v138 = vunpack.c.l.b16 %v74
    %v139 = vunpack.c.l.b16 %v75
    %v140 = vunpack.c.l.b16 %v76
    %v141 = vunpack.c.l.b16 %v77
    %v142 = vunpack.c.l.b16 %v78
    %v143 = vunpack.c.l.b16 %v79
    %v144 = vunpack.c.l.b16 %v80
    %v145 = vunpack.c.l.b16 %v81
    %v146 = vunpack.c.l.b16 %v82
    %v147 = vunpack.c.l.b16 %v83
    %v148 = vunpack.c.l.b16 %v84
    %v149 = vunpack.c.l.b16 %v85
    %v150 = vunpack.c.l.b16 %v86
    %v151 = vunpack.c.l.b16 %v87
    %v152 = vunpack.c.l.b16 %v88
    %v153 = vunpack.c.l.b16 %v89
    %v154 = vunpack.c.l.b16 %v90
    %v155 = vunpack.c.l.b16 %v91
    %v156 = vunpack.c.l.b16 %v92
    %v157 = vunpack.c.l.b16 %v93
    %v158 = vunpack.c.l.b16 %v94
    %v159 = vunpack.c.l.b16 %v95
    %v160 = vunpack.c.l.b16 %v96
    %v161 = vunpack.c.l.b16 %v97
    %v162 = vpack.c.b16 %v131, %v130
    %v163 = vpack.c.b16 %v133, %v132
    %v164 = vpack.c.b16 %v135, %v134
    %v165 = vpack.c.b16 %v137, %v136
    %v166 = vpack.c.b16 %v139, %v138
    %v167 = vpack.c.b16 %v141, %v140
    %v168 = vpack.c.b16 %v143, %v142
    %v169 = vpack.c.b16 %v145, %v144
    %v170 = vpack.c.b16 %v147, %v146
    %v171 = vpack.c.b16 %v149, %v148
    %v172 = vpack.c.b16 %v151, %v150
    %v173 = vpack.c.b16 %v153, %v152
    %v174 = vpack.c.b16 %v155, %v154
    %v175 = vpack.c.b16 %v157, %v156
    %v176 = vpack.c.b16 %v159, %v158
    %v177 = vpack.c.b16 %v161, %v160
    %194 = vmatpush.bf16.msra.mxu0 %v169
    %195 = vmatpush.bf16.msra.mxu0 %v168
    %196 = vmatpush.bf16.msra.mxu0 %v167
    %197 = vmatpush.bf16.msra.mxu0 %v166
    %198 = vmatpush.bf16.msra.mxu0 %v165
    %199 = vmatpush.bf16.msra.mxu0 %v164
    %200 = vmatpush.bf16.msra.mxu0 %v163
    %201 = vmatpush.bf16.msra.mxu0 %v162
    %202 = vmatmul.bf16.gmra.mxu0 %v62
    %v203 = vpop.f32.mrf.mxu0
    %v204 = vadd.f32 0.0, %v203
    %v205 = vpop.f32.mrf.mxu0
    %v206 = vadd.f32 0.0, %v205
    %207 = vmatmul.bf16.gmra.mxu0 %v64
    %v208 = vpop.f32.mrf.mxu0
    %v209 = vadd.f32 0.0, %v208
    %v210 = vpop.f32.mrf.mxu0
    %v211 = vadd.f32 0.0, %v210
    %212 = vdwg.mxu0
    %213 = vmatpush.bf16.msra.mxu0 %v177
    %214 = vmatpush.bf16.msra.mxu0 %v176
    %215 = vmatpush.bf16.msra.mxu0 %v175
    %216 = vmatpush.bf16.msra.mxu0 %v174
    %217 = vmatpush.bf16.msra.mxu0 %v173
    %218 = vmatpush.bf16.msra.mxu0 %v172
    %219 = vmatpush.bf16.msra.mxu0 %v171
    %220 = vmatpush.bf16.msra.mxu0 %v170
    %221 = vmatmul.bf16.gmra.mxu0 %v63
    %v222 = vpop.f32.mrf.mxu0
    %v223 = vadd.f32 %v204, %v222
    %v224 = vpop.f32.mrf.mxu0
    %v225 = vadd.f32 %v206, %v224
    %226 = vmatmul.bf16.gmra.mxu0 %v65
    %v227 = vpop.f32.mrf.mxu0
    %v228 = vadd.f32 %v209, %v227
    %v229 = vpop.f32.mrf.mxu0
    %v230 = vadd.f32 %v211, %v229
    %231 = vdwg.mxu0
    %v236 = vunpack.c.l.b16 %v42
    %v237 = vunpack.c.h.b16 %v42
    %v238 = vunpack.c.l.b16 %v43
    %v239 = vunpack.c.h.b16 %v43
    %v240 = vunpack.c.l.b16 %v44
    %v241 = vunpack.c.h.b16 %v44
    %v242 = vunpack.c.l.b16 %v45
    %v243 = vunpack.c.h.b16 %v45
    %v244 = vpack.c.b16 %v238, %v236
    %v245 = vpack.c.b16 %v239, %v237
    %v246 = vpack.c.b16 %v242, %v240
    %v247 = vpack.c.b16 %v243, %v241
    %252 = vmatpush.bf16.msra.mxu0 %v169
    %253 = vmatpush.bf16.msra.mxu0 %v168
    %254 = vmatpush.bf16.msra.mxu0 %v167
    %255 = vmatpush.bf16.msra.mxu0 %v166
    %256 = vmatpush.bf16.msra.mxu0 %v165
    %257 = vmatpush.bf16.msra.mxu0 %v164
    %258 = vmatpush.bf16.msra.mxu0 %v163
    %259 = vmatpush.bf16.msra.mxu0 %v162
    %260 = vmatmul.bf16.gmra.mxu0 %v244
    %v261 = vpop.f32.mrf.mxu0
    %v262 = vadd.f32 %v223, %v261
    %v263 = vpop.f32.mrf.mxu0
    %v264 = vadd.f32 %v225, %v263
    %265 = vmatmul.bf16.gmra.mxu0 %v246
    %v266 = vpop.f32.mrf.mxu0
    %v267 = vadd.f32 %v228, %v266
    %v268 = vpop.f32.mrf.mxu0
    %v269 = vadd.f32 %v230, %v268
    %270 = vdwg.mxu0
    %271 = vmatpush.bf16.msra.mxu0 %v177
    %272 = vmatpush.bf16.msra.mxu0 %v176
    %273 = vmatpush.bf16.msra.mxu0 %v175
    %274 = vmatpush.bf16.msra.mxu0 %v174
    %275 = vmatpush.bf16.msra.mxu0 %v173
    %276 = vmatpush.bf16.msra.mxu0 %v172
    %277 = vmatpush.bf16.msra.mxu0 %v171
    %278 = vmatpush.bf16.msra.mxu0 %v170
    %279 = vmatmul.bf16.gmra.mxu0 %v245
    %v280 = vpop.f32.mrf.mxu0
    %v281 = vadd.f32 %v262, %v280
    %v282 = vpop.f32.mrf.mxu0
    %v283 = vadd.f32 %v264, %v282
    %284 = vmatmul.bf16.gmra.mxu0 %v247
    %v285 = vpop.f32.mrf.mxu0
    %v286 = vadd.f32 %v267, %v285
    %v287 = vpop.f32.mrf.mxu0
    %v288 = vadd.f32 %v269, %v287
    %289 = vdwg.mxu0
    %v290 = vstv %s19
    %v291 = vadd.f32 %v281, %v290
    %v292 = vadd.f32 %v283, %v290
    %v293 = vadd.f32 %v286, %v290
    %v294 = vadd.f32 %v288, %v290
    %v295 = vmul.f32 %v291, 0.5
    %v296 = vmul.f32 %v292, 0.5
    %v297 = vmul.f32 %v293, 0.5
    %v298 = vmul.f32 %v294, 0.5
    %v299 = vtanh.pop %v295
    %v300 = vtanh.pop %v296
    %v301 = vtanh.pop %v297
    %v302 = vtanh.pop %v298
    %v303 = vmul.f32 %v299, 0.5
    %v304 = vmul.f32 %v300, 0.5
    %v305 = vmul.f32 %v301, 0.5
    %v306 = vmul.f32 %v302, 0.5
    %v307 = vadd.f32 %v303, 0.5
    %v308 = vadd.f32 %v304, 0.5
    %v309 = vadd.f32 %v305, 0.5
    %v310 = vadd.f32 %v306, 0.5
    %311 = vst [vmem:[#allocation3] sm:$0xff] %v307
    %312 = vst [vmem:[#allocation3 + $0x8] sm:$0xff] %v308
    %313 = vst [vmem:[#allocation3 + $0x10] sm:$0xff] %v309
    %314 = vst [vmem:[#allocation3 + $0x18] sm:$0xff] %v310
    // Predicated region
    $region18: #{logistic_forward.1} parent=1 // pred_check
      _
    $region19: #{logistic_forward.1} parent=1 // pred_check_branch
      %316 = sbr.rel (0) target = $region21
    $region20: #{logistic_forward.1} parent=1 // pred_region
      %318 = vsyncadd [#allocation4], 0
      %s319 = sshll.u32 [#allocation3], 4
      %s320 = int_to_ptr.vmem [resolvable:$true] %s319
      %s321 = sshll.u32 %s4, 4
      %s322 = int_to_ptr.hbm [resolvable:$true] %s321
      %327 = dma.vmem_to_hbm [thread:$0]  %s320, 512, %s322, [#allocation4], 128, 128, 8
    $region21: #{logistic_forward.1} parent=1 // pred_fallthru
      _
    // Predicated region
    $region22: #{logistic_forward.1} parent=1 // pred_check
      _
    $region23: #{logistic_forward.1} parent=1 // pred_check_branch
      %329 = sbr.rel (0) target = $region25
    $region24: #{logistic_forward.1} parent=1 // pred_region
      %331 = dma.done [#allocation4], 512
    $region25: #{logistic_forward.1} parent=1 // pred_fallthru
      _
    %332 = vsyncpa [#allocation4], 1

</llo_original>
